<compile_context>
chip_gen: v6e
topology: v6e:2x2x1
jax: 0.10.0
libtpu: 0.0.40
codegen_flags: <defaults>
</compile_context>

<pallas_src>
import functools
import numpy as np
import jax
import jax.numpy as jnp
from jax import lax
from jax.experimental import pallas as pl
from jax.experimental.pallas import tpu as pltpu

LANE = 128     # lanes per vreg row
CHUNK = 16     # sublanes per inner compute chunk -> 2 vregs per temp
MAX_TR = 512   # max sublanes per grid step: 2 MiB in + 4 MiB out per block


def _round_up(x, m):
    return (x + m - 1) // m * m


def _num_tensorcores():
    # Only multi-TC chips (v7x) benefit from forcing a >=2-block split.
    try:
        kind = jax.devices()[0].device_kind.lower()
    except Exception:
        return 1
    return 2 if "v7" in kind else 1


def _limb_kernel(in_ref, out_ref, *, min_length_sq, eps, chunk):
    # in_ref : (8, TR, 128)   field planes (pa.xyz, pb.xyz, w^2, pad)
    # out_ref: (16, TR, 128)  field planes (mu.xyz, R row-major, lambd, pad)
    tr = in_ref.shape[1]
    n_chunks = tr // chunk
    for c in range(n_chunks):            # static, fully unrolled; chunk-local deps
        o = c * chunk
        sl = slice(o, o + chunk)

        pax = in_ref[0, sl, :]
        pay = in_ref[1, sl, :]
        paz = in_ref[2, sl, :]
        pbx = in_ref[3, sl, :]
        pby = in_ref[4, sl, :]
        pbz = in_ref[5, sl, :]
        w2 = in_ref[6, sl, :]

        # ---- limb center --------------------------------------------------
        out_ref[0, sl, :] = 0.5 * (pax + pbx)
        out_ref[1, sl, :] = 0.5 * (pay + pby)
        out_ref[2, sl, :] = 0.5 * (paz + pbz)

        # ---- half bone vector & unit direction -----------------------------
        dx = 0.5 * (pbx - pax)
        dy = 0.5 * (pby - pay)
        dz = 0.5 * (pbz - paz)
        sq = dx * dx + dy * dy + dz * dz            # squared (half) length
        inv_len = lax.rsqrt(sq + eps)
        bx = dx * inv_len
        by = dy * inv_len
        bz = dz * inv_len

        # ---- Rodrigues rotation R with R @ e_x = b --------------------------
        denom = 1.0 + bx
        antip = denom < 1e-6                        # b ~ -e_x -> 180deg about z
        k = 1.0 / jnp.where(antip, 1.0, denom)      # exact reciprocal (EUP)
        zero = jnp.zeros_like(bx)
        one = jnp.ones_like(bx)
        neg_one = -one
        kb12 = k * by * bz
        sel_kb12 = jnp.where(antip, zero, -kb12)    # CSE: used for R12 and R21

        out_ref[3, sl, :] = jnp.where(antip, neg_one, bx)                 # R00
        out_ref[4, sl, :] = jnp.where(antip, zero, -by)                   # R01
        out_ref[5, sl, :] = jnp.where(antip, zero, -bz)                   # R02
        out_ref[6, sl, :] = jnp.where(antip, zero, by)                    # R10
        out_ref[7, sl, :] = jnp.where(antip, neg_one, 1.0 - k * by * by)  # R11
        out_ref[8, sl, :] = sel_kb12                                      # R12
        out_ref[9, sl, :] = jnp.where(antip, zero, bz)                    # R20
        out_ref[10, sl, :] = sel_kb12                                     # R21
        out_ref[11, sl, :] = jnp.where(antip, one, 1.0 - k * bz * bz)     # R22

        # ---- lambd: (clamped squared length, width^2, width^2) --------------
        out_ref[12, sl, :] = jnp.maximum(sq, min_length_sq)
        out_ref[13, sl, :] = w2
        out_ref[14, sl, :] = w2
        out_ref[15, sl, :] = zero                   # pad plane (deterministic)


def pose3d_to_joints_and_limbs(points, edges, widths, radius=0.02, min_length=0.001):
    """points: [*, N, 3, 1] -> (mu [*, N+M, 3, 1], rho [*, N+M, 3, 3], lambd [*, N+M, 3, 1])."""
    points = jnp.asarray(points, jnp.float32)
    batch_shape = points.shape[:-3]
    N = points.shape[-3]
    edges = np.asarray(edges, dtype=np.int32)
    M = edges.shape[0]
    B = int(np.prod(batch_shape)) if len(batch_shape) else 1
    BM = B * M

    pts = points.reshape(B, N, 3)

    # ---- joints: constants / pass-through, no kernel needed -----------------
    mu_j = pts.reshape(B, N, 3, 1)
    rho_j = jnp.broadcast_to(jnp.eye(3, dtype=jnp.float32), (B, N, 3, 3))
    lam_j = jnp.full((B, N, 3, 1), float(radius) * float(radius), dtype=jnp.float32)

    # ---- limbs: field-major fused slab (8, B*M) ------------------------------
    pa = pts[:, edges[:, 0], :]                    # (B, M, 3)
    pb = pts[:, edges[:, 1], :]
    w = jnp.asarray(widths, jnp.float32).reshape(M)
    w2 = jnp.broadcast_to((w * w)[None, :], (B, M))
    fields = [pa[..., 0], pa[..., 1], pa[..., 2],
              pb[..., 0], pb[..., 1], pb[..., 2],
              w2, jnp.zeros((B, M), jnp.float32)]
    slab = jnp.stack([f.reshape(BM) for f in fields], axis=0)   # (8, B*M)

    # ---- dense-plane layout sizes -------------------------------------------
    # R_total sublanes of 128 lanes each; multiple of CHUNK so chunks divide evenly.
    R_total = max(CHUNK, _round_up(pl.cdiv(BM, LANE), CHUNK))
    n_tc = _num_tensorcores()
    if R_total <= MAX_TR:
        TR = R_total
        if n_tc > 1 and R_total >= 2 * CHUNK:
            TR = _round_up(R_total // 2, CHUNK)    # >=2 blocks only on multi-TC chips
    else:
        TR = MAX_TR
    R = _round_up(R_total, TR)
    P = R * LANE

    slab = jnp.pad(slab, ((0, 0), (0, P - BM))).reshape(8, R, LANE)
    grid = (R // TR,)

    kernel = functools.partial(
        _limb_kernel,
        min_length_sq=float(min_length) * float(min_length),
        eps=1e-12,
        chunk=CHUNK,
    )

    out = pl.pallas_call(
        kernel,
        out_shape=jax.ShapeDtypeStruct((16, R, LANE), jnp.float32),
        grid=grid,
        in_specs=[pl.BlockSpec((8, TR, LANE), lambda i: (0, i, 0))],
        out_specs=pl.BlockSpec((16, TR, LANE), lambda i: (0, i, 0)),
        compiler_params=pltpu.CompilerParams(
            dimension_semantics=("parallel",),
            vmem_limit_bytes=48 * 1024 * 1024,
        ),
    )(slab)

    # single transpose back to limb-major, then cheap slices
    valid = out.reshape(16, P)[:, :BM].T           # (B*M, 16)
    mu_l = valid[:, 0:3].reshape(B, M, 3, 1)
    rho_l = valid[:, 3:12].reshape(B, M, 3, 3)
    lam_l = valid[:, 12:15].reshape(B, M, 3, 1)

    mu = jnp.concatenate([mu_j, mu_l], axis=1).reshape(batch_shape + (N + M, 3, 1))
    rho = jnp.concatenate([rho_j, rho_l], axis=1).reshape(batch_shape + (N + M, 3, 3))
    lam = jnp.concatenate([lam_j, lam_l], axis=1).reshape(batch_shape + (N + M, 3, 1))
    return mu, rho, lam


if __name__ == "__main__":
    key = jax.random.PRNGKey(0)
    B, N = 2, 8
    edges = tuple((i, i + 1) for i in range(N - 1))          # chain skeleton, M = 7
    M = len(edges)
    widths = 0.05 + 0.01 * jnp.arange(M, dtype=jnp.float32)  # per-limb widths [M]
    points = jax.random.normal(key, (B, N, 3, 1), dtype=jnp.float32)

    mu, rho, lam = pose3d_to_joints_and_limbs(points, edges, widths,
                                              radius=0.02, min_length=0.001)
    mu, rho, lam = jax.block_until_ready((mu, rho, lam))

    assert mu.shape == (B, N + M, 3, 1)
    assert rho.shape == (B, N + M, 3, 3)
    assert lam.shape == (B, N + M, 3, 1)

    # ---- joints: mu = points, rho = I, lambd = radius^2 ----------------------
    assert np.allclose(np.asarray(mu[:, :N]), np.asarray(points), atol=1e-6)
    assert np.allclose(np.asarray(rho[:, :N]), np.eye(3, dtype=np.float32), atol=1e-6)
    assert np.allclose(np.asarray(lam[:, :N]), 0.02 ** 2, atol=1e-8)

    # ---- limbs (single advanced index so numpy keeps the (B, M, 3) order) ----
    pts_np = np.asarray(points)[..., 0]                   # (B, N, 3)
    e_np = np.asarray(edges)
    pa_np = pts_np[:, e_np[:, 0], :]                      # (B, M, 3)
    pb_np = pts_np[:, e_np[:, 1], :]
    d = 0.5 * (pb_np - pa_np)

    assert np.allclose(np.asarray(mu[:, N:, :, 0]), 0.5 * (pa_np + pb_np), atol=1e-6)
    dn = d / np.linalg.norm(d, axis=-1, keepdims=True)
    assert np.allclose(np.asarray(rho[:, N:, :, 0]), dn, atol=1e-5)
    # rho should be (nearly) orthonormal with exact reciprocal
    rr = np.asarray(rho[:, N:])
    assert np.allclose(rr @ rr.transpose(0, 1, 3, 2), np.eye(3), atol=1e-4)
    sq = (d ** 2).sum(-1)
    assert np.allclose(np.asarray(lam[:, N:, 0, 0]), np.maximum(sq, 0.001 ** 2), atol=1e-6)
    w_np = np.asarray(widths)
    assert np.allclose(np.asarray(lam[:, N:, 1, 0]), np.broadcast_to(w_np ** 2, (B, M)), atol=1e-7)
    assert np.allclose(np.asarray(lam[:, N:, 2, 0]), np.broadcast_to(w_np ** 2, (B, M)), atol=1e-7)

    print("KERNEL_OK")
</pallas_src>

<mosaic_0001>
module attributes {stable_mosaic.version = 11 : i64} {
  func.func @_limb_kernel(%arg0: i32, %arg1: memref<8x16x128xf32, #tpu.memory_space<vmem>>, %arg2: memref<16x16x128xf32, #tpu.memory_space<vmem>>) attributes {dimension_semantics = [#tpu.dimension_semantics<parallel>], iteration_bounds = array<i64: 1>, scalar_prefetch = 0 : i64, scratch_operands = 0 : i64, tpu.core_type = #tpu.core_type<tc>, window_params = [{transform_indices = @transform_0, window_bounds = array<i64: 8, 16, 128>}, {transform_indices = @transform_1, window_bounds = array<i64: 16, 16, 128>}]} {
    %c0 = arith.constant 0 : index
    %c0_0 = arith.constant 0 : index
    %c0_1 = arith.constant 0 : index
    %0 = vector.load %arg1[%c0, %c0_0, %c0_1] : memref<8x16x128xf32, #tpu.memory_space<vmem>>, vector<1x16x128xf32>
    %1 = vector.shape_cast %0 : vector<1x16x128xf32> to vector<16x128xf32>
    %c1 = arith.constant 1 : index
    %c0_2 = arith.constant 0 : index
    %c0_3 = arith.constant 0 : index
    %2 = vector.load %arg1[%c1, %c0_2, %c0_3] : memref<8x16x128xf32, #tpu.memory_space<vmem>>, vector<1x16x128xf32>
    %3 = vector.shape_cast %2 : vector<1x16x128xf32> to vector<16x128xf32>
    %c2 = arith.constant 2 : index
    %c0_4 = arith.constant 0 : index
    %c0_5 = arith.constant 0 : index
    %4 = vector.load %arg1[%c2, %c0_4, %c0_5] : memref<8x16x128xf32, #tpu.memory_space<vmem>>, vector<1x16x128xf32>
    %5 = vector.shape_cast %4 : vector<1x16x128xf32> to vector<16x128xf32>
    %c3 = arith.constant 3 : index
    %c0_6 = arith.constant 0 : index
    %c0_7 = arith.constant 0 : index
    %6 = vector.load %arg1[%c3, %c0_6, %c0_7] : memref<8x16x128xf32, #tpu.memory_space<vmem>>, vector<1x16x128xf32>
    %7 = vector.shape_cast %6 : vector<1x16x128xf32> to vector<16x128xf32>
    %c4 = arith.constant 4 : index
    %c0_8 = arith.constant 0 : index
    %c0_9 = arith.constant 0 : index
    %8 = vector.load %arg1[%c4, %c0_8, %c0_9] : memref<8x16x128xf32, #tpu.memory_space<vmem>>, vector<1x16x128xf32>
    %9 = vector.shape_cast %8 : vector<1x16x128xf32> to vector<16x128xf32>
    %c5 = arith.constant 5 : index
    %c0_10 = arith.constant 0 : index
    %c0_11 = arith.constant 0 : index
    %10 = vector.load %arg1[%c5, %c0_10, %c0_11] : memref<8x16x128xf32, #tpu.memory_space<vmem>>, vector<1x16x128xf32>
    %11 = vector.shape_cast %10 : vector<1x16x128xf32> to vector<16x128xf32>
    %c6 = arith.constant 6 : index
    %c0_12 = arith.constant 0 : index
    %c0_13 = arith.constant 0 : index
    %12 = vector.load %arg1[%c6, %c0_12, %c0_13] : memref<8x16x128xf32, #tpu.memory_space<vmem>>, vector<1x16x128xf32>
    %13 = vector.shape_cast %12 : vector<1x16x128xf32> to vector<16x128xf32>
    %14 = arith.addf %1, %7 : vector<16x128xf32>
    %cst = arith.constant 5.000000e-01 : f32
    %15 = vector.broadcast %cst : f32 to vector<16x128xf32>
    %16 = arith.mulf %15, %14 : vector<16x128xf32>
    %c0_14 = arith.constant 0 : index
    %c0_15 = arith.constant 0 : index
    %c0_16 = arith.constant 0 : index
    %17 = vector.load %arg2[%c0_14, %c0_15, %c0_16] : memref<16x16x128xf32, #tpu.memory_space<vmem>>, vector<1x16x128xf32>
    %18 = vector.shape_cast %17 : vector<1x16x128xf32> to vector<16x128xf32>
    %19 = vector.shape_cast %16 : vector<16x128xf32> to vector<1x16x128xf32>
    tpu.vector_store %arg2[%c0_14, %c0_15, %c0_16], %19 {strides = array<i32>} : memref<16x16x128xf32, #tpu.memory_space<vmem>>, vector<1x16x128xf32>,
    %20 = arith.addf %3, %9 : vector<16x128xf32>
    %cst_17 = arith.constant 5.000000e-01 : f32
    %21 = vector.broadcast %cst_17 : f32 to vector<16x128xf32>
    %22 = arith.mulf %21, %20 : vector<16x128xf32>
    %c1_18 = arith.constant 1 : index
    %c0_19 = arith.constant 0 : index
    %c0_20 = arith.constant 0 : index
    %23 = vector.load %arg2[%c1_18, %c0_19, %c0_20] : memref<16x16x128xf32, #tpu.memory_space<vmem>>, vector<1x16x128xf32>
    %24 = vector.shape_cast %23 : vector<1x16x128xf32> to vector<16x128xf32>
    %25 = vector.shape_cast %22 : vector<16x128xf32> to vector<1x16x128xf32>
    tpu.vector_store %arg2[%c1_18, %c0_19, %c0_20], %25 {strides = array<i32>} : memref<16x16x128xf32, #tpu.memory_space<vmem>>, vector<1x16x128xf32>,
    %26 = arith.addf %5, %11 : vector<16x128xf32>
    %cst_21 = arith.constant 5.000000e-01 : f32
    %27 = vector.broadcast %cst_21 : f32 to vector<16x128xf32>
    %28 = arith.mulf %27, %26 : vector<16x128xf32>
    %c2_22 = arith.constant 2 : index
    %c0_23 = arith.constant 0 : index
    %c0_24 = arith.constant 0 : index
    %29 = vector.load %arg2[%c2_22, %c0_23, %c0_24] : memref<16x16x128xf32, #tpu.memory_space<vmem>>, vector<1x16x128xf32>
    %30 = vector.shape_cast %29 : vector<1x16x128xf32> to vector<16x128xf32>
    %31 = vector.shape_cast %28 : vector<16x128xf32> to vector<1x16x128xf32>
    tpu.vector_store %arg2[%c2_22, %c0_23, %c0_24], %31 {strides = array<i32>} : memref<16x16x128xf32, #tpu.memory_space<vmem>>, vector<1x16x128xf32>,
    %32 = arith.subf %7, %1 : vector<16x128xf32>
    %cst_25 = arith.constant 5.000000e-01 : f32
    %33 = vector.broadcast %cst_25 : f32 to vector<16x128xf32>
    %34 = arith.mulf %33, %32 : vector<16x128xf32>
    %35 = arith.subf %9, %3 : vector<16x128xf32>
    %cst_26 = arith.constant 5.000000e-01 : f32
    %36 = vector.broadcast %cst_26 : f32 to vector<16x128xf32>
    %37 = arith.mulf %36, %35 : vector<16x128xf32>
    %38 = arith.subf %11, %5 : vector<16x128xf32>
    %cst_27 = arith.constant 5.000000e-01 : f32
    %39 = vector.broadcast %cst_27 : f32 to vector<16x128xf32>
    %40 = arith.mulf %39, %38 : vector<16x128xf32>
    %41 = arith.mulf %34, %34 : vector<16x128xf32>
    %42 = arith.mulf %37, %37 : vector<16x128xf32>
    %43 = arith.addf %41, %42 : vector<16x128xf32>
    %44 = arith.mulf %40, %40 : vector<16x128xf32>
    %45 = arith.addf %43, %44 : vector<16x128xf32>
    %cst_28 = arith.constant 9.99999996E-13 : f32
    %46 = vector.broadcast %cst_28 : f32 to vector<16x128xf32>
    %47 = arith.addf %45, %46 : vector<16x128xf32>
    %48 = math.rsqrt %47 : vector<16x128xf32>
    %49 = arith.mulf %34, %48 : vector<16x128xf32>
    %50 = arith.mulf %37, %48 : vector<16x128xf32>
    %51 = arith.mulf %40, %48 : vector<16x128xf32>
    %cst_29 = arith.constant 1.000000e+00 : f32
    %52 = vector.broadcast %cst_29 : f32 to vector<16x128xf32>
    %53 = arith.addf %52, %49 : vector<16x128xf32>
    %cst_30 = arith.constant 9.99999997E-7 : f32
    %54 = vector.broadcast %cst_30 : f32 to vector<16x128xf32>
    %55 = arith.cmpf olt, %53, %54 : vector<16x128xf32>
    %cst_31 = arith.constant 1.000000e+00 : f32
    %56 = vector.broadcast %cst_31 : f32 to vector<16x128xf32>
    %57 = arith.select %55, %56, %53 : vector<16x128xi1>, vector<16x128xf32>
    %cst_32 = arith.constant 1.000000e+00 : f32
    %58 = vector.broadcast %cst_32 : f32 to vector<16x128xf32>
    %59 = arith.divf %58, %57 : vector<16x128xf32>
    %cst_33 = arith.constant 0.000000e+00 : f32
    %60 = vector.broadcast %cst_33 : f32 to vector<16x128xf32>
    %cst_34 = arith.constant 1.000000e+00 : f32
    %61 = vector.broadcast %cst_34 : f32 to vector<16x128xf32>
    %cst_35 = arith.constant 0.000000e+00 : f32
    %62 = vector.broadcast %cst_35 : f32 to vector<16x128xf32>
    %63 = arith.subf %62, %61 : vector<16x128xf32>
    %64 = arith.mulf %59, %50 : vector<16x128xf32>
    %65 = arith.mulf %64, %51 : vector<16x128xf32>
    %cst_36 = arith.constant 0.000000e+00 : f32
    %66 = vector.broadcast %cst_36 : f32 to vector<16x128xf32>
    %67 = arith.subf %66, %65 : vector<16x128xf32>
    %68 = arith.select %55, %60, %67 : vector<16x128xi1>, vector<16x128xf32>
    %69 = arith.select %55, %63, %49 : vector<16x128xi1>, vector<16x128xf32>
    %c3_37 = arith.constant 3 : index
    %c0_38 = arith.constant 0 : index
    %c0_39 = arith.constant 0 : index
    %70 = vector.load %arg2[%c3_37, %c0_38, %c0_39] : memref<16x16x128xf32, #tpu.memory_space<vmem>>, vector<1x16x128xf32>
    %71 = vector.shape_cast %70 : vector<1x16x128xf32> to vector<16x128xf32>
    %72 = vector.shape_cast %69 : vector<16x128xf32> to vector<1x16x128xf32>
    tpu.vector_store %arg2[%c3_37, %c0_38, %c0_39], %72 {strides = array<i32>} : memref<16x16x128xf32, #tpu.memory_space<vmem>>, vector<1x16x128xf32>,
    %cst_40 = arith.constant 0.000000e+00 : f32
    %73 = vector.broadcast %cst_40 : f32 to vector<16x128xf32>
    %74 = arith.subf %73, %50 : vector<16x128xf32>
    %75 = arith.select %55, %60, %74 : vector<16x128xi1>, vector<16x128xf32>
    %c4_41 = arith.constant 4 : index
    %c0_42 = arith.constant 0 : index
    %c0_43 = arith.constant 0 : index
    %76 = vector.load %arg2[%c4_41, %c0_42, %c0_43] : memref<16x16x128xf32, #tpu.memory_space<vmem>>, vector<1x16x128xf32>
    %77 = vector.shape_cast %76 : vector<1x16x128xf32> to vector<16x128xf32>
    %78 = vector.shape_cast %75 : vector<16x128xf32> to vector<1x16x128xf32>
    tpu.vector_store %arg2[%c4_41, %c0_42, %c0_43], %78 {strides = array<i32>} : memref<16x16x128xf32, #tpu.memory_space<vmem>>, vector<1x16x128xf32>,
    %cst_44 = arith.constant 0.000000e+00 : f32
    %79 = vector.broadcast %cst_44 : f32 to vector<16x128xf32>
    %80 = arith.subf %79, %51 : vector<16x128xf32>
    %81 = arith.select %55, %60, %80 : vector<16x128xi1>, vector<16x128xf32>
    %c5_45 = arith.constant 5 : index
    %c0_46 = arith.constant 0 : index
    %c0_47 = arith.constant 0 : index
    %82 = vector.load %arg2[%c5_45, %c0_46, %c0_47] : memref<16x16x128xf32, #tpu.memory_space<vmem>>, vector<1x16x128xf32>
    %83 = vector.shape_cast %82 : vector<1x16x128xf32> to vector<16x128xf32>
    %84 = vector.shape_cast %81 : vector<16x128xf32> to vector<1x16x128xf32>
    tpu.vector_store %arg2[%c5_45, %c0_46, %c0_47], %84 {strides = array<i32>} : memref<16x16x128xf32, #tpu.memory_space<vmem>>, vector<1x16x128xf32>,
    %85 = arith.select %55, %60, %50 : vector<16x128xi1>, vector<16x128xf32>
    %c6_48 = arith.constant 6 : index
    %c0_49 = arith.constant 0 : index
    %c0_50 = arith.constant 0 : index
    %86 = vector.load %arg2[%c6_48, %c0_49, %c0_50] : memref<16x16x128xf32, #tpu.memory_space<vmem>>, vector<1x16x128xf32>
    %87 = vector.shape_cast %86 : vector<1x16x128xf32> to vector<16x128xf32>
    %88 = vector.shape_cast %85 : vector<16x128xf32> to vector<1x16x128xf32>
    tpu.vector_store %arg2[%c6_48, %c0_49, %c0_50], %88 {strides = array<i32>} : memref<16x16x128xf32, #tpu.memory_space<vmem>>, vector<1x16x128xf32>,
    %89 = arith.mulf %59, %50 : vector<16x128xf32>
    %90 = arith.mulf %89, %50 : vector<16x128xf32>
    %cst_51 = arith.constant 1.000000e+00 : f32
    %91 = vector.broadcast %cst_51 : f32 to vector<16x128xf32>
    %92 = arith.subf %91, %90 : vector<16x128xf32>
    %93 = arith.select %55, %63, %92 : vector<16x128xi1>, vector<16x128xf32>
    %c7 = arith.constant 7 : index
    %c0_52 = arith.constant 0 : index
    %c0_53 = arith.constant 0 : index
    %94 = vector.load %arg2[%c7, %c0_52, %c0_53] : memref<16x16x128xf32, #tpu.memory_space<vmem>>, vector<1x16x128xf32>
    %95 = vector.shape_cast %94 : vector<1x16x128xf32> to vector<16x128xf32>
    %96 = vector.shape_cast %93 : vector<16x128xf32> to vector<1x16x128xf32>
    tpu.vector_store %arg2[%c7, %c0_52, %c0_53], %96 {strides = array<i32>} : memref<16x16x128xf32, #tpu.memory_space<vmem>>, vector<1x16x128xf32>,
    %c8 = arith.constant 8 : index
    %c0_54 = arith.constant 0 : index
    %c0_55 = arith.constant 0 : index
    %97 = vector.load %arg2[%c8, %c0_54, %c0_55] : memref<16x16x128xf32, #tpu.memory_space<vmem>>, vector<1x16x128xf32>
    %98 = vector.shape_cast %97 : vector<1x16x128xf32> to vector<16x128xf32>
    %99 = vector.shape_cast %68 : vector<16x128xf32> to vector<1x16x128xf32>
    tpu.vector_store %arg2[%c8, %c0_54, %c0_55], %99 {strides = array<i32>} : memref<16x16x128xf32, #tpu.memory_space<vmem>>, vector<1x16x128xf32>,
    %100 = arith.select %55, %60, %51 : vector<16x128xi1>, vector<16x128xf32>
    %c9 = arith.constant 9 : index
    %c0_56 = arith.constant 0 : index
    %c0_57 = arith.constant 0 : index
    %101 = vector.load %arg2[%c9, %c0_56, %c0_57] : memref<16x16x128xf32, #tpu.memory_space<vmem>>, vector<1x16x128xf32>
    %102 = vector.shape_cast %101 : vector<1x16x128xf32> to vector<16x128xf32>
    %103 = vector.shape_cast %100 : vector<16x128xf32> to vector<1x16x128xf32>
    tpu.vector_store %arg2[%c9, %c0_56, %c0_57], %103 {strides = array<i32>} : memref<16x16x128xf32, #tpu.memory_space<vmem>>, vector<1x16x128xf32>,
    %c10 = arith.constant 10 : index
    %c0_58 = arith.constant 0 : index
    %c0_59 = arith.constant 0 : index
    %104 = vector.load %arg2[%c10, %c0_58, %c0_59] : memref<16x16x128xf32, #tpu.memory_space<vmem>>, vector<1x16x128xf32>
    %105 = vector.shape_cast %104 : vector<1x16x128xf32> to vector<16x128xf32>
    %106 = vector.shape_cast %68 : vector<16x128xf32> to vector<1x16x128xf32>
    tpu.vector_store %arg2[%c10, %c0_58, %c0_59], %106 {strides = array<i32>} : memref<16x16x128xf32, #tpu.memory_space<vmem>>, vector<1x16x128xf32>,
    %107 = arith.mulf %59, %51 : vector<16x128xf32>
    %108 = arith.mulf %107, %51 : vector<16x128xf32>
    %cst_60 = arith.constant 1.000000e+00 : f32
    %109 = vector.broadcast %cst_60 : f32 to vector<16x128xf32>
    %110 = arith.subf %109, %108 : vector<16x128xf32>
    %111 = arith.select %55, %61, %110 : vector<16x128xi1>, vector<16x128xf32>
    %c11 = arith.constant 11 : index
    %c0_61 = arith.constant 0 : index
    %c0_62 = arith.constant 0 : index
    %112 = vector.load %arg2[%c11, %c0_61, %c0_62] : memref<16x16x128xf32, #tpu.memory_space<vmem>>, vector<1x16x128xf32>
    %113 = vector.shape_cast %112 : vector<1x16x128xf32> to vector<16x128xf32>
    %114 = vector.shape_cast %111 : vector<16x128xf32> to vector<1x16x128xf32>
    tpu.vector_store %arg2[%c11, %c0_61, %c0_62], %114 {strides = array<i32>} : memref<16x16x128xf32, #tpu.memory_space<vmem>>, vector<1x16x128xf32>,
    %cst_63 = arith.constant 9.99999997E-7 : f32
    %115 = vector.broadcast %cst_63 : f32 to vector<16x128xf32>
    %116 = arith.maximumf %45, %115 : vector<16x128xf32>
    %c12 = arith.constant 12 : index
    %c0_64 = arith.constant 0 : index
    %c0_65 = arith.constant 0 : index
    %117 = vector.load %arg2[%c12, %c0_64, %c0_65] : memref<16x16x128xf32, #tpu.memory_space<vmem>>, vector<1x16x128xf32>
    %118 = vector.shape_cast %117 : vector<1x16x128xf32> to vector<16x128xf32>
    %119 = vector.shape_cast %116 : vector<16x128xf32> to vector<1x16x128xf32>
    tpu.vector_store %arg2[%c12, %c0_64, %c0_65], %119 {strides = array<i32>} : memref<16x16x128xf32, #tpu.memory_space<vmem>>, vector<1x16x128xf32>,
    %c13 = arith.constant 13 : index
    %c0_66 = arith.constant 0 : index
    %c0_67 = arith.constant 0 : index
    %120 = vector.load %arg2[%c13, %c0_66, %c0_67] : memref<16x16x128xf32, #tpu.memory_space<vmem>>, vector<1x16x128xf32>
    %121 = vector.shape_cast %120 : vector<1x16x128xf32> to vector<16x128xf32>
    %122 = vector.shape_cast %13 : vector<16x128xf32> to vector<1x16x128xf32>
    tpu.vector_store %arg2[%c13, %c0_66, %c0_67], %122 {strides = array<i32>} : memref<16x16x128xf32, #tpu.memory_space<vmem>>, vector<1x16x128xf32>,
    %c14 = arith.constant 14 : index
    %c0_68 = arith.constant 0 : index
    %c0_69 = arith.constant 0 : index
    %123 = vector.load %arg2[%c14, %c0_68, %c0_69] : memref<16x16x128xf32, #tpu.memory_space<vmem>>, vector<1x16x128xf32>
    %124 = vector.shape_cast %123 : vector<1x16x128xf32> to vector<16x128xf32>
    %125 = vector.shape_cast %13 : vector<16x128xf32> to vector<1x16x128xf32>
    tpu.vector_store %arg2[%c14, %c0_68, %c0_69], %125 {strides = array<i32>} : memref<16x16x128xf32, #tpu.memory_space<vmem>>, vector<1x16x128xf32>,
    %c15 = arith.constant 15 : index
    %c0_70 = arith.constant 0 : index
    %c0_71 = arith.constant 0 : index
    %126 = vector.load %arg2[%c15, %c0_70, %c0_71] : memref<16x16x128xf32, #tpu.memory_space<vmem>>, vector<1x16x128xf32>
    %127 = vector.shape_cast %126 : vector<1x16x128xf32> to vector<16x128xf32>
    %128 = vector.shape_cast %60 : vector<16x128xf32> to vector<1x16x128xf32>
    tpu.vector_store %arg2[%c15, %c0_70, %c0_71], %128 {strides = array<i32>} : memref<16x16x128xf32, #tpu.memory_space<vmem>>, vector<1x16x128xf32>,
    return
  }
  func.func @transform_0(%arg0: i32) -> (i32, i32, i32) {
    %c0_i32 = arith.constant 0 : i32
    %c0_i32_0 = arith.constant 0 : i32
    %c0_i32_1 = arith.constant 0 : i32
    return %c0_i32, %arg0, %c0_i32_0 : i32, i32, i32
  }
  func.func @transform_1(%arg0: i32) -> (i32, i32, i32) {
    %c0_i32 = arith.constant 0 : i32
    %c0_i32_0 = arith.constant 0 : i32
    %c0_i32_1 = arith.constant 0 : i32
    return %c0_i32, %arg0, %c0_i32_0 : i32, i32, i32
  }
}

</mosaic_0001>

<llo_original>
// kernel: tpu_custom_call.1
$region0: #{tpu_custom_call.1}
  #allocation0 [shape = 'u32[]', space=smem, size = 0x4, offset = 0x4, fixed_abs, tag = 'smem constant byte address 0x4 - core index']
  #allocation1 [shape = 'u32[144,128]{1,0:T(1,128)}', space=vmem, size = 0x12000, scoped, tag = 'internal scratch']
  %s0 = inlined_call_operand.hbm [shape: f32[8,16,128], index: 0, kind: input, shape index: {}]
  %s1 = inlined_call_operand.hbm [shape: f32[16,16,128], index: 1, kind: output, shape index: {}]
  %s2 = sld [smem:[#allocation0]]
  $region18: #{tpu_custom_call.1} parent=0
    _
  %s4 = ssub.s32 1, %s2
  %s5 = scalar_select 0, %s4, %s2
  $region1: #{tpu_custom_call.1} parent=0
    #allocation2 [shape = 'u8[65536]{0}', space=vmem, size = 0x10000, scoped, tag = 'input window, operand 0, single buffered']
    #allocation3 [shape = 's32[1]{0}', space=sflag, size = 0x4, scoped, tag = 'scoped memory for tpu_custom_call.1']
    #allocation4 [shape = 's32[1]{0}', space=sflag, size = 0x4, scoped, tag = 'scoped memory for tpu_custom_call.1']
    #allocation5 [shape = 'u8[131072]{0}', space=vmem, size = 0x20000, scoped, tag = 'output window, operand 0, single buffered']
    %6 = vsyncpa [#allocation3], 0
    %7 = vsyncpa [#allocation4], 0
    // Predicated region
    $region2: #{tpu_custom_call.1} parent=1 // pred_check
      _
    $region3: #{tpu_custom_call.1} parent=1 // pred_check_branch
      %9 = sbr.rel (0) target = $region5
    $region4: #{tpu_custom_call.1} parent=1 // pred_region
      %s11 = ssub.s32 2048, 2048
      %12 = vsyncadd [#allocation3], %s11
      %s13 = sshll.u32 [#allocation2], 4
      %s14 = int_to_ptr.vmem [resolvable:$true] %s13
      %19 = dma.hbm_to_vmem [thread:$0]  %s0, 2048, %s14, [#allocation3], 128, 128, 8
    $region5: #{tpu_custom_call.1} parent=1 // pred_fallthru
      _
    // Predicated region
    $region6: #{tpu_custom_call.1} parent=1 // pred_check
      _
    $region7: #{tpu_custom_call.1} parent=1 // pred_check_branch
      %21 = sbr.rel (0) target = $region9
    $region8: #{tpu_custom_call.1} parent=1 // pred_region
      %22 = dma.done [#allocation3], 2048
    $region9: #{tpu_custom_call.1} parent=1 // pred_fallthru
      _
    %v23 = vld [vmem:[#allocation2] sm:$0xff]
    %v24 = vld [vmem:[#allocation2 + $0x8] sm:$0xff]
    %s25 = scalar_lea.vmem [#allocation2], 16
    %v26 = vld [vmem:[%s25] sm:$0xff]
    %v27 = vld [vmem:[%s25 + $0x8] sm:$0xff]
    %s28 = scalar_lea.vmem [#allocation2], 32
    %v29 = vld [vmem:[%s28] sm:$0xff]
    %v30 = vld [vmem:[%s28 + $0x8] sm:$0xff]
    %s31 = scalar_lea.vmem [#allocation2], 48
    %v32 = vld [vmem:[%s31] sm:$0xff]
    %v33 = vld [vmem:[%s31 + $0x8] sm:$0xff]
    %s34 = scalar_lea.vmem [#allocation2], 64
    %v35 = vld [vmem:[%s34] sm:$0xff]
    %v36 = vld [vmem:[%s34 + $0x8] sm:$0xff]
    %s37 = scalar_lea.vmem [#allocation2], 80
    %v38 = vld [vmem:[%s37] sm:$0xff]
    %v39 = vld [vmem:[%s37 + $0x8] sm:$0xff]
    %s40 = scalar_lea.vmem [#allocation2], 96
    %v41 = vld [vmem:[%s40] sm:$0xff]
    %v42 = vld [vmem:[%s40 + $0x8] sm:$0xff]
    %v43 = vadd.f32 %v23, %v32
    %v44 = vadd.f32 %v24, %v33
    %v45 = vmul.f32 %v43, 0.5
    %v46 = vmul.f32 %v44, 0.5
    %47 = vst [vmem:[#allocation5] sm:$0xff] %v45
    %48 = vst [vmem:[#allocation5 + $0x8] sm:$0xff] %v46
    %v49 = vadd.f32 %v26, %v35
    %v50 = vadd.f32 %v27, %v36
    %v51 = vmul.f32 %v49, 0.5
    %v52 = vmul.f32 %v50, 0.5
    %s53 = scalar_lea.vmem [#allocation5], 16
    %54 = vst [vmem:[%s53] sm:$0xff] %v51
    %55 = vst [vmem:[%s53 + $0x8] sm:$0xff] %v52
    %v56 = vadd.f32 %v29, %v38
    %v57 = vadd.f32 %v30, %v39
    %v58 = vmul.f32 %v56, 0.5
    %v59 = vmul.f32 %v57, 0.5
    %s60 = scalar_lea.vmem [#allocation5], 32
    %61 = vst [vmem:[%s60] sm:$0xff] %v58
    %62 = vst [vmem:[%s60 + $0x8] sm:$0xff] %v59
    %v63 = vsub.f32 %v32, %v23
    %v64 = vsub.f32 %v33, %v24
    %v65 = vmul.f32 %v63, 0.5
    %v66 = vmul.f32 %v64, 0.5
    %v67 = vsub.f32 %v35, %v26
    %v68 = vsub.f32 %v36, %v27
    %v69 = vmul.f32 %v67, 0.5
    %v70 = vmul.f32 %v68, 0.5
    %v71 = vsub.f32 %v38, %v29
    %v72 = vsub.f32 %v39, %v30
    %v73 = vmul.f32 %v71, 0.5
    %v74 = vmul.f32 %v72, 0.5
    %v75 = vmul.f32 %v65, %v65
    %v76 = vmul.f32 %v66, %v66
    %v77 = vmul.f32 %v69, %v69
    %v78 = vmul.f32 %v70, %v70
    %v79 = vadd.f32 %v75, %v77
    %v80 = vadd.f32 %v76, %v78
    %v81 = vmul.f32 %v73, %v73
    %v82 = vmul.f32 %v74, %v74
    %v83 = vadd.f32 %v79, %v81
    %v84 = vadd.f32 %v80, %v82
    %v85 = vadd.f32 %v83, 1e-12
    %v86 = vadd.f32 %v84, 1e-12
    %v87 = vrsqrt.pop %v85
    %v88 = vrsqrt.pop %v86
    %v89 = vmul.f32 %v65, %v87
    %v90 = vmul.f32 %v66, %v88
    %v91 = vmul.f32 %v69, %v87
    %v92 = vmul.f32 %v70, %v88
    %v93 = vmul.f32 %v73, %v87
    %v94 = vmul.f32 %v74, %v88
    %v95 = vadd.f32 %v89, 1.0
    %v96 = vadd.f32 %v90, 1.0
    %vm97 = vcmp.lt.f32.partialorder %v95, 1e-06
    %vm98 = vcmp.lt.f32.partialorder %v96, 1e-06
    %v99 = vsel %vm97, 1.0, %v95
    %v100 = vsel %vm98, 1.0, %v96
    %v101 = vrcp.pop %v99
    %v102 = vmul.f32 1.0, %v101
    %v103 = vrcp.pop %v100
    %v104 = vmul.f32 1.0, %v103
    %v105 = vmul.f32 %v102, %v91
    %v106 = vmul.f32 %v104, %v92
    %v107 = vmul.f32 %v105, %v93
    %v108 = vmul.f32 %v106, %v94
    %v109 = vsub.f32 0.0, %v107
    %v110 = vsub.f32 0.0, %v108
    %v111 = vsel %vm97, 0.0, %v109
    %v112 = vsel %vm98, 0.0, %v110
    %v113 = vsel %vm97, -1.0, %v89
    %v114 = vsel %vm98, -1.0, %v90
    %s115 = scalar_lea.vmem [#allocation5], 48
    %116 = vst [vmem:[%s115] sm:$0xff] %v113
    %117 = vst [vmem:[%s115 + $0x8] sm:$0xff] %v114
    %v118 = vsub.f32 0.0, %v91
    %v119 = vsub.f32 0.0, %v92
    %v120 = vsel %vm97, 0.0, %v118
    %v121 = vsel %vm98, 0.0, %v119
    %s122 = scalar_lea.vmem [#allocation5], 64
    %123 = vst [vmem:[%s122] sm:$0xff] %v120
    %124 = vst [vmem:[%s122 + $0x8] sm:$0xff] %v121
    %v125 = vsub.f32 0.0, %v93
    %v126 = vsub.f32 0.0, %v94
    %v127 = vsel %vm97, 0.0, %v125
    %v128 = vsel %vm98, 0.0, %v126
    %s129 = scalar_lea.vmem [#allocation5], 80
    %130 = vst [vmem:[%s129] sm:$0xff] %v127
    %131 = vst [vmem:[%s129 + $0x8] sm:$0xff] %v128
    %v132 = vsel %vm97, 0.0, %v91
    %v133 = vsel %vm98, 0.0, %v92
    %s134 = scalar_lea.vmem [#allocation5], 96
    %135 = vst [vmem:[%s134] sm:$0xff] %v132
    %136 = vst [vmem:[%s134 + $0x8] sm:$0xff] %v133
    %v137 = vmul.f32 %v105, %v91
    %v138 = vmul.f32 %v106, %v92
    %v139 = vsub.f32 1.0, %v137
    %v140 = vsub.f32 1.0, %v138
    %v141 = vsel %vm97, -1.0, %v139
    %v142 = vsel %vm98, -1.0, %v140
    %s143 = scalar_lea.vmem [#allocation5], 112
    %144 = vst [vmem:[%s143] sm:$0xff] %v141
    %145 = vst [vmem:[%s143 + $0x8] sm:$0xff] %v142
    %s146 = scalar_lea.vmem [#allocation5], 128
    %147 = vst [vmem:[%s146] sm:$0xff] %v111
    %148 = vst [vmem:[%s146 + $0x8] sm:$0xff] %v112
    %v149 = vsel %vm97, 0.0, %v93
    %v150 = vsel %vm98, 0.0, %v94
    %s151 = scalar_lea.vmem [#allocation5], 144
    %152 = vst [vmem:[%s151] sm:$0xff] %v149
    %153 = vst [vmem:[%s151 + $0x8] sm:$0xff] %v150
    %s154 = scalar_lea.vmem [#allocation5], 160
    %155 = vst [vmem:[%s154] sm:$0xff] %v111
    %156 = vst [vmem:[%s154 + $0x8] sm:$0xff] %v112
    %v157 = vmul.f32 %v102, %v93
    %v158 = vmul.f32 %v104, %v94
    %v159 = vmul.f32 %v157, %v93
    %v160 = vmul.f32 %v158, %v94
    %v161 = vsub.f32 1.0, %v159
    %v162 = vsub.f32 1.0, %v160
    %v163 = vsel %vm97, 1.0, %v161
    %v164 = vsel %vm98, 1.0, %v162
    %s165 = scalar_lea.vmem [#allocation5], 176
    %166 = vst [vmem:[%s165] sm:$0xff] %v163
    %167 = vst [vmem:[%s165 + $0x8] sm:$0xff] %v164
    %v168 = vmax.f32 %v83, 1e-06
    %v169 = vmax.f32 %v84, 1e-06
    %s170 = scalar_lea.vmem [#allocation5], 192
    %171 = vst [vmem:[%s170] sm:$0xff] %v168
    %172 = vst [vmem:[%s170 + $0x8] sm:$0xff] %v169
    %s173 = scalar_lea.vmem [#allocation5], 208
    %174 = vst [vmem:[%s173] sm:$0xff] %v41
    %175 = vst [vmem:[%s173 + $0x8] sm:$0xff] %v42
    %s176 = scalar_lea.vmem [#allocation5], 224
    %177 = vst [vmem:[%s176] sm:$0xff] %v41
    %178 = vst [vmem:[%s176 + $0x8] sm:$0xff] %v42
    %s179 = scalar_lea.vmem [#allocation5], 240
    %180 = vst [vmem:[%s179] sm:$0xff] 0.0
    %181 = vst [vmem:[%s179 + $0x8] sm:$0xff] 0.0
    // Predicated region
    $region10: #{tpu_custom_call.1} parent=1 // pred_check
      _
    $region11: #{tpu_custom_call.1} parent=1 // pred_check_branch
      %183 = sbr.rel (0) target = $region13
    $region12: #{tpu_custom_call.1} parent=1 // pred_region
      %s185 = ssub.s32 4096, 4096
      %186 = vsyncadd [#allocation4], %s185
      %s187 = sshll.u32 [#allocation5], 4
      %s188 = int_to_ptr.vmem [resolvable:$true] %s187
      %193 = dma.vmem_to_hbm [thread:$0]  %s188, 4096, %s1, [#allocation4], 128, 128, 8
    $region13: #{tpu_custom_call.1} parent=1 // pred_fallthru
      _
    // Predicated region
    $region14: #{tpu_custom_call.1} parent=1 // pred_check
      _
    $region15: #{tpu_custom_call.1} parent=1 // pred_check_branch
      %195 = sbr.rel (0) target = $region17
    $region16: #{tpu_custom_call.1} parent=1 // pred_region
      %196 = dma.done [#allocation4], 4096
    $region17: #{tpu_custom_call.1} parent=1 // pred_fallthru
      _
    %197 = vsyncpa [#allocation3], 1
    %198 = vsyncpa [#allocation4], 1

</llo_original>
